<compile_context>
chip_gen: v7x
topology: tpu7x:2x2x1
jax: 0.10.0
libtpu: 0.0.40
codegen_flags: <defaults>
</compile_context>

<pallas_src>
import functools

import jax
import jax.numpy as jnp
import numpy as np
from jax import lax
from jax.experimental import pallas as pl
from jax.experimental.pallas import tpu as pltpu

HEAD_NUM = 8


def _spectral_kernel(x_ref, fcat_ref, w4_ref, icat_ref, o_ref, x4_sc, yc_sc,
                     *, BT, H, E, O, M):
    # x_ref:    (BT, D, L)      input, rows within D ordered (e, h)
    # fcat_ref: (L, 4M)         [cos | -sin | -sin | cos] forward truncated-rfft basis
    # w4_ref:   (E*O, H, 4M)    [W_re | W_re | -W_im | W_im], flat index = e*O + o
    # icat_ref: (2M, L)         truncated irfft basis (hermitian fold + 1/L folded in)
    # o_ref:    (BT, D, L)      output, rows within D ordered (o, h)
    # x4_sc:    (D, 4M) VMEM    forward-DFT slab   [X_re | X_im | X_im | X_re]
    # yc_sc:    (D, 2M) VMEM    mixed modes        [Y_re | Y_im]
    TWO_M = 2 * M
    fcat = fcat_ref[...]
    icat = icat_ref[...]

    for b in range(BT):                                    # BT is a small static int
        # fused truncated forward DFT (one MXU matmul over all (e, h) rows)
        x4_sc[...] = jnp.dot(x_ref[b], fcat, preferred_element_type=jnp.float32)

        # per-mode complex channel mixing: Y[o,h,m] = sum_e X[e,h,m] * W[h,e,o,m]
        @pl.loop(0, O)
        def _(o):
            def e_body(e, acc):
                xe = x4_sc[pl.ds(pl.multiple_of(e * H, H), H), :]      # (H, 4M)
                we = w4_ref[e * O + o]                                 # (H, 4M)
                return acc + xe * we

            acc = lax.fori_loop(0, E, e_body,
                                jnp.zeros((H, 4 * M), jnp.float32),
                                unroll=min(E, 8))
            # halves-fold: [Xre*Wre | Xim*Wre] + [-Xim*Wim | Xre*Wim] = [Y_re | Y_im]
            yc_sc[pl.ds(pl.multiple_of(o * H, H), H), :] = (
                acc[:, :TWO_M] + acc[:, TWO_M:])

        # fused truncated inverse rfft back to length L; rows ordered (o, h)
        o_ref[b] = jnp.dot(yc_sc[...], icat,
                           preferred_element_type=jnp.float32).astype(o_ref.dtype)


def precompute_spectral_constants(w_re, w_im, in_len):
    """Init-time constants: truncated DFT/iDFT bases + lane-fused weight table."""
    H, E, O, M = w_re.shape
    L = in_len
    # load-bearing: c_m=2 folding assumes the Nyquist bin is never among the kept modes
    assert M <= L // 2

    l_idx = jnp.arange(L, dtype=jnp.float32)[:, None]                   # (L, 1)
    m_idx = jnp.arange(M, dtype=jnp.float32)[None, :]                   # (1, M)
    ang_f = 2.0 * jnp.pi * l_idx * m_idx / L                            # (L, M)
    cos_f, sin_f = jnp.cos(ang_f), jnp.sin(ang_f)
    # x @ fcat4 -> [X_re | X_im | X_im | X_re]
    fcat4 = jnp.concatenate([cos_f, -sin_f, -sin_f, cos_f], axis=1)     # (L, 4M)

    # truncated irfft: y[l] = (1/L) sum_m c_m (Y_re[m] cos - Y_im[m] sin), c_0=1, c_m=2.
    # Im(Y[0]) is dropped via sin(0)=0, matching irfft's handling of a non-hermitian DC bin.
    c = jnp.where(jnp.arange(M) == 0, 1.0, 2.0).astype(jnp.float32)[:, None]
    ang_i = (2.0 * jnp.pi * jnp.arange(M, dtype=jnp.float32)[:, None]
             * jnp.arange(L, dtype=jnp.float32)[None, :] / L)           # (M, L)
    icat = jnp.concatenate([(c / L) * jnp.cos(ang_i),
                            -(c / L) * jnp.sin(ang_i)], axis=0)         # (2M, L)

    # weights for (e,h)-ordered activations and the 4M lane layout
    wr = jnp.transpose(w_re.astype(jnp.float32), (1, 2, 0, 3))          # (E, O, H, M)
    wi = jnp.transpose(w_im.astype(jnp.float32), (1, 2, 0, 3))          # (E, O, H, M)
    w4 = jnp.concatenate([wr, wr, -wi, wi], axis=-1)                    # (E, O, H, 4M)
    w4 = w4.reshape(E * O, H, 4 * M)                                    # flat = e*O + o
    return fcat4, w4, icat


@functools.partial(jax.jit, static_argnames=("head_num", "batch_tile"))
def spectral_conv1d_apply(x, consts, head_num=HEAD_NUM, batch_tile=None):
    """x: [B, D, L] float32; consts from precompute_spectral_constants. Returns [B, D, L]."""
    fcat4, w4, icat = consts
    B, D, L = x.shape
    H = head_num
    E = D // H
    O = E
    FOUR_M = fcat4.shape[1]
    M = FOUR_M // 4
    TWO_M = 2 * M
    assert D % H == 0

    bt = B if batch_tile is None else min(batch_tile, B)
    assert B % bt == 0

    x = x.astype(jnp.float32)
    # (h,e) -> (e,h) channel reorder, HBM-side (was an in-kernel DxD matmul before)
    x_eh = x.reshape(B, H, E, L).transpose(0, 2, 1, 3).reshape(B, D, L)

    kernel = functools.partial(_spectral_kernel, BT=bt, H=H, E=E, O=O, M=M)

    out = pl.pallas_call(
        kernel,
        out_shape=jax.ShapeDtypeStruct((B, D, L), jnp.float32),
        grid=(B // bt,),
        in_specs=[
            pl.BlockSpec((bt, D, L), lambda g: (g, 0, 0)),              # x (rows (e,h))
            pl.BlockSpec((L, FOUR_M), lambda g: (0, 0)),                # fcat4
            pl.BlockSpec((E * O, H, FOUR_M), lambda g: (0, 0, 0)),      # w4
            pl.BlockSpec((TWO_M, L), lambda g: (0, 0)),                 # icat
        ],
        out_specs=pl.BlockSpec((bt, D, L), lambda g: (g, 0, 0)),
        scratch_shapes=[
            pltpu.VMEM((D, FOUR_M), jnp.float32),                       # x4_sc
            pltpu.VMEM((D, TWO_M), jnp.float32),                        # yc_sc
        ],
        compiler_params=pltpu.CompilerParams(
            dimension_semantics=("parallel",),
            vmem_limit_bytes=32 * 1024 * 1024),
    )(x_eh, fcat4, w4, icat)

    # (o,h) -> (h,o) channel reorder back to 'b (h e) l'
    return out.reshape(B, O, H, L).transpose(0, 2, 1, 3).reshape(B, D, L)


def spectral_conv1d(x, w_re, w_im, head_num=HEAD_NUM):
    consts = precompute_spectral_constants(w_re, w_im, x.shape[-1])
    return spectral_conv1d_apply(x, consts, head_num=head_num)


def reference(x, w_re, w_im, head_num=HEAD_NUM):
    """Pure-JAX reference mirroring the PyTorch FourierBlock forward (lower modes)."""
    B, D, L = x.shape
    H = head_num
    E = D // H
    M = w_re.shape[-1]
    xh = x.reshape(B, H, E, L)
    x_ft = jnp.fft.rfft(xh, axis=-1)                                    # (B,H,E,L//2+1)
    W = (w_re + 1j * w_im).astype(jnp.complex64)                        # (H,E,O,M)
    y_modes = jnp.einsum('bhem,heom->bhom', x_ft[..., :M], W)           # (B,H,O,M)
    out_ft = jnp.zeros((B, H, E, L // 2 + 1), dtype=jnp.complex64)
    out_ft = out_ft.at[..., :M].set(y_modes)
    y = jnp.fft.irfft(out_ft, n=L, axis=-1)                             # (B,H,O,L)
    return y.reshape(B, D, L)


if __name__ == "__main__":
    key = jax.random.PRNGKey(0)
    B, D, L = 2, 32, 64                     # batch, in_channels (divisible by 8), in_len
    H = HEAD_NUM
    E = D // H
    M = min(32, L // 2)                     # modes=32, 'lower' selection

    k_x, k_wr, k_wi = jax.random.split(key, 3)
    x = jax.random.normal(k_x, (B, D, L), dtype=jnp.float32)

    # weights1 = scale * torch.rand(8, in//8, out//8, M, cfloat): real & imag ~ U[0,1)*scale
    scale = 1.0 / (D * D)
    w_re = scale * jax.random.uniform(k_wr, (H, E, E, M), dtype=jnp.float32)
    w_im = scale * jax.random.uniform(k_wi, (H, E, E, M), dtype=jnp.float32)

    consts = precompute_spectral_constants(w_re, w_im, L)   # init-time, cached in a real model
    out = spectral_conv1d_apply(x, consts)
    out = jax.block_until_ready(out)
    assert out.shape == (B, D, L)

    ref = reference(x, w_re, w_im)
    np.testing.assert_allclose(np.asarray(out), np.asarray(ref), atol=2e-4, rtol=1e-3)

    print("KERNEL_OK")
</pallas_src>

<mosaic_0001>
module attributes {stable_mosaic.version = 11 : i64} {
  func.func @_spectral_kernel(%arg0: i32, %arg1: memref<2x32x64xf32, #tpu.memory_space<vmem>>, %arg2: memref<64x128xf32, #tpu.memory_space<vmem>>, %arg3: memref<16x8x128xf32, #tpu.memory_space<vmem>>, %arg4: memref<64x64xf32, #tpu.memory_space<vmem>>, %arg5: memref<2x32x64xf32, #tpu.memory_space<vmem>>, %arg6: memref<32x128xf32, #tpu.memory_space<vmem>>, %arg7: memref<32x64xf32, #tpu.memory_space<vmem>>) attributes {dimension_semantics = [#tpu.dimension_semantics<parallel>], iteration_bounds = array<i64: 1>, scalar_prefetch = 0 : i64, scratch_operands = 2 : i64, tpu.core_type = #tpu.core_type<tc>, window_params = [{transform_indices = @transform_0, window_bounds = array<i64: 2, 32, 64>}, {pipeline_mode = #tpu.pipeline_mode<synchronous>, transform_indices = @transform_1, window_bounds = array<i64: 64, 128>}, {pipeline_mode = #tpu.pipeline_mode<synchronous>, transform_indices = @transform_2, window_bounds = array<i64: 16, 8, 128>}, {pipeline_mode = #tpu.pipeline_mode<synchronous>, transform_indices = @transform_3, window_bounds = array<i64: 64, 64>}, {transform_indices = @transform_4, window_bounds = array<i64: 2, 32, 64>}]} {
    %c0 = arith.constant 0 : index
    %c0_0 = arith.constant 0 : index
    %0 = vector.load %arg2[%c0, %c0_0] : memref<64x128xf32, #tpu.memory_space<vmem>>, vector<64x128xf32>
    %c0_1 = arith.constant 0 : index
    %c0_2 = arith.constant 0 : index
    %1 = vector.load %arg4[%c0_1, %c0_2] : memref<64x64xf32, #tpu.memory_space<vmem>>, vector<64x64xf32>
    %c0_3 = arith.constant 0 : index
    %c0_4 = arith.constant 0 : index
    %c0_5 = arith.constant 0 : index
    %2 = vector.load %arg1[%c0_3, %c0_4, %c0_5] : memref<2x32x64xf32, #tpu.memory_space<vmem>>, vector<1x32x64xf32>
    %3 = vector.shape_cast %2 : vector<1x32x64xf32> to vector<32x64xf32>
    %cst = arith.constant dense<0.000000e+00> : vector<32x128xf32>
    %4 = tpu.matmul %3, %0, %cst {dimension_numbers = #tpu.dot_dimension_numbers<[1], [0], [0], [1], [0, 0, 1, 1], [], []>} : vector<32x64xf32>, vector<64x128xf32>, vector<32x128xf32> -> vector<32x128xf32>
    %c0_6 = arith.constant 0 : index
    %c0_7 = arith.constant 0 : index
    %5 = vector.load %arg6[%c0_6, %c0_7] : memref<32x128xf32, #tpu.memory_space<vmem>>, vector<32x128xf32>
    tpu.vector_store %arg6[%c0_6, %c0_7], %4 {strides = array<i32>} : memref<32x128xf32, #tpu.memory_space<vmem>>, vector<32x128xf32>,
    %c0_i32 = arith.constant 0 : i32
    %c4_i32 = arith.constant 4 : i32
    %6 = arith.addi %c0_i32, %c4_i32 : i32
    %c1_i32 = arith.constant 1 : i32
    scf.for %arg8 = %c0_i32 to %6 step %c1_i32  : i32 {
      %c1_i32_30 = arith.constant 1 : i32
      %22 = arith.muli %arg8, %c1_i32_30 : i32
      %c0_i32_31 = arith.constant 0 : i32
      %23 = arith.addi %c0_i32_31, %22 : i32
      %cst_32 = arith.constant 0.000000e+00 : f32
      %24 = vector.broadcast %cst_32 : f32 to vector<8x128xf32>
      %c0_i32_33 = arith.constant 0 : i32
      %c8_i32 = arith.constant 8 : i32
      %25 = arith.muli %c0_i32_33, %c8_i32 : i32
      %26 = tpu.assume_multiple %25, 8 : i32
      %27 = arith.index_cast %26 : i32 to index
      %c0_34 = arith.constant 0 : index
      %28 = vector.load %arg6[%27, %c0_34] : memref<32x128xf32, #tpu.memory_space<vmem>>, vector<8x128xf32>
      %c4_i32_35 = arith.constant 4 : i32
      %29 = arith.muli %c0_i32_33, %c4_i32_35 : i32
      %30 = arith.addi %29, %23 : i32
      %31 = arith.index_cast %30 : i32 to index
      %c0_36 = arith.constant 0 : index
      %c0_37 = arith.constant 0 : index
      %32 = vector.load %arg3[%31, %c0_36, %c0_37] : memref<16x8x128xf32, #tpu.memory_space<vmem>>, vector<1x8x128xf32>
      %33 = vector.shape_cast %32 : vector<1x8x128xf32> to vector<8x128xf32>
      %34 = arith.mulf %28, %33 : vector<8x128xf32>
      %35 = arith.addf %24, %34 : vector<8x128xf32>
      %c1_i32_38 = arith.constant 1 : i32
      %c8_i32_39 = arith.constant 8 : i32
      %36 = arith.muli %c1_i32_38, %c8_i32_39 : i32
      %37 = tpu.assume_multiple %36, 8 : i32
      %38 = arith.index_cast %37 : i32 to index
      %c0_40 = arith.constant 0 : index
      %39 = vector.load %arg6[%38, %c0_40] : memref<32x128xf32, #tpu.memory_space<vmem>>, vector<8x128xf32>
      %c4_i32_41 = arith.constant 4 : i32
      %40 = arith.muli %c1_i32_38, %c4_i32_41 : i32
      %41 = arith.addi %40, %23 : i32
      %42 = arith.index_cast %41 : i32 to index
      %c0_42 = arith.constant 0 : index
      %c0_43 = arith.constant 0 : index
      %43 = vector.load %arg3[%42, %c0_42, %c0_43] : memref<16x8x128xf32, #tpu.memory_space<vmem>>, vector<1x8x128xf32>
      %44 = vector.shape_cast %43 : vector<1x8x128xf32> to vector<8x128xf32>
      %45 = arith.mulf %39, %44 : vector<8x128xf32>
      %46 = arith.addf %35, %45 : vector<8x128xf32>
      %c2_i32 = arith.constant 2 : i32
      %c8_i32_44 = arith.constant 8 : i32
      %47 = arith.muli %c2_i32, %c8_i32_44 : i32
      %48 = tpu.assume_multiple %47, 8 : i32
      %49 = arith.index_cast %48 : i32 to index
      %c0_45 = arith.constant 0 : index
      %50 = vector.load %arg6[%49, %c0_45] : memref<32x128xf32, #tpu.memory_space<vmem>>, vector<8x128xf32>
      %c4_i32_46 = arith.constant 4 : i32
      %51 = arith.muli %c2_i32, %c4_i32_46 : i32
      %52 = arith.addi %51, %23 : i32
      %53 = arith.index_cast %52 : i32 to index
      %c0_47 = arith.constant 0 : index
      %c0_48 = arith.constant 0 : index
      %54 = vector.load %arg3[%53, %c0_47, %c0_48] : memref<16x8x128xf32, #tpu.memory_space<vmem>>, vector<1x8x128xf32>
      %55 = vector.shape_cast %54 : vector<1x8x128xf32> to vector<8x128xf32>
      %56 = arith.mulf %50, %55 : vector<8x128xf32>
      %57 = arith.addf %46, %56 : vector<8x128xf32>
      %c3_i32 = arith.constant 3 : i32
      %c8_i32_49 = arith.constant 8 : i32
      %58 = arith.muli %c3_i32, %c8_i32_49 : i32
      %59 = tpu.assume_multiple %58, 8 : i32
      %60 = arith.index_cast %59 : i32 to index
      %c0_50 = arith.constant 0 : index
      %61 = vector.load %arg6[%60, %c0_50] : memref<32x128xf32, #tpu.memory_space<vmem>>, vector<8x128xf32>
      %c4_i32_51 = arith.constant 4 : i32
      %62 = arith.muli %c3_i32, %c4_i32_51 : i32
      %63 = arith.addi %62, %23 : i32
      %64 = arith.index_cast %63 : i32 to index
      %c0_52 = arith.constant 0 : index
      %c0_53 = arith.constant 0 : index
      %65 = vector.load %arg3[%64, %c0_52, %c0_53] : memref<16x8x128xf32, #tpu.memory_space<vmem>>, vector<1x8x128xf32>
      %66 = vector.shape_cast %65 : vector<1x8x128xf32> to vector<8x128xf32>
      %67 = arith.mulf %61, %66 : vector<8x128xf32>
      %68 = arith.addf %57, %67 : vector<8x128xf32>
      %c4_i32_54 = arith.constant 4 : i32
      %69 = vector.extract_strided_slice %68 {offsets = [0, 0], sizes = [8, 64], strides = [1, 1]} : vector<8x128xf32> to vector<8x64xf32>
      %70 = vector.extract_strided_slice %68 {offsets = [0, 64], sizes = [8, 64], strides = [1, 1]} : vector<8x128xf32> to vector<8x64xf32>
      %71 = arith.addf %69, %70 : vector<8x64xf32>
      %c8_i32_55 = arith.constant 8 : i32
      %72 = arith.muli %23, %c8_i32_55 : i32
      %73 = tpu.assume_multiple %72, 8 : i32
      %74 = arith.index_cast %73 : i32 to index
      %c0_56 = arith.constant 0 : index
      %75 = vector.load %arg7[%74, %c0_56] : memref<32x64xf32, #tpu.memory_space<vmem>>, vector<8x64xf32>
      tpu.vector_store %arg7[%74, %c0_56], %71 {strides = array<i32>} : memref<32x64xf32, #tpu.memory_space<vmem>>, vector<8x64xf32>,
    }
    %c4_i32_8 = arith.constant 4 : i32
    %c0_9 = arith.constant 0 : index
    %c0_10 = arith.constant 0 : index
    %7 = vector.load %arg7[%c0_9, %c0_10] : memref<32x64xf32, #tpu.memory_space<vmem>>, vector<32x64xf32>
    %cst_11 = arith.constant dense<0.000000e+00> : vector<32x64xf32>
    %8 = tpu.matmul %7, %1, %cst_11 {dimension_numbers = #tpu.dot_dimension_numbers<[1], [0], [0], [1], [0, 0, 1, 1], [], []>} : vector<32x64xf32>, vector<64x64xf32>, vector<32x64xf32> -> vector<32x64xf32>
    %c0_12 = arith.constant 0 : index
    %c0_13 = arith.constant 0 : index
    %c0_14 = arith.constant 0 : index
    %9 = vector.load %arg5[%c0_12, %c0_13, %c0_14] : memref<2x32x64xf32, #tpu.memory_space<vmem>>, vector<1x32x64xf32>
    %10 = vector.shape_cast %9 : vector<1x32x64xf32> to vector<32x64xf32>
    %11 = vector.shape_cast %8 : vector<32x64xf32> to vector<1x32x64xf32>
    tpu.vector_store %arg5[%c0_12, %c0_13, %c0_14], %11 {strides = array<i32>} : memref<2x32x64xf32, #tpu.memory_space<vmem>>, vector<1x32x64xf32>,
    %c1 = arith.constant 1 : index
    %c0_15 = arith.constant 0 : index
    %c0_16 = arith.constant 0 : index
    %12 = vector.load %arg1[%c1, %c0_15, %c0_16] : memref<2x32x64xf32, #tpu.memory_space<vmem>>, vector<1x32x64xf32>
    %13 = vector.shape_cast %12 : vector<1x32x64xf32> to vector<32x64xf32>
    %cst_17 = arith.constant dense<0.000000e+00> : vector<32x128xf32>
    %14 = tpu.matmul %13, %0, %cst_17 {dimension_numbers = #tpu.dot_dimension_numbers<[1], [0], [0], [1], [0, 0, 1, 1], [], []>} : vector<32x64xf32>, vector<64x128xf32>, vector<32x128xf32> -> vector<32x128xf32>
    %c0_18 = arith.constant 0 : index
    %c0_19 = arith.constant 0 : index
    %15 = vector.load %arg6[%c0_18, %c0_19] : memref<32x128xf32, #tpu.memory_space<vmem>>, vector<32x128xf32>
    tpu.vector_store %arg6[%c0_18, %c0_19], %14 {strides = array<i32>} : memref<32x128xf32, #tpu.memory_space<vmem>>, vector<32x128xf32>,
    %c0_i32_20 = arith.constant 0 : i32
    %c4_i32_21 = arith.constant 4 : i32
    %16 = arith.addi %c0_i32_20, %c4_i32_21 : i32
    %c1_i32_22 = arith.constant 1 : i32
    scf.for %arg8 = %c0_i32_20 to %16 step %c1_i32_22  : i32 {
      %c1_i32_30 = arith.constant 1 : i32
      %22 = arith.muli %arg8, %c1_i32_30 : i32
      %c0_i32_31 = arith.constant 0 : i32
      %23 = arith.addi %c0_i32_31, %22 : i32
      %cst_32 = arith.constant 0.000000e+00 : f32
      %24 = vector.broadcast %cst_32 : f32 to vector<8x128xf32>
      %c0_i32_33 = arith.constant 0 : i32
      %c8_i32 = arith.constant 8 : i32
      %25 = arith.muli %c0_i32_33, %c8_i32 : i32
      %26 = tpu.assume_multiple %25, 8 : i32
      %27 = arith.index_cast %26 : i32 to index
      %c0_34 = arith.constant 0 : index
      %28 = vector.load %arg6[%27, %c0_34] : memref<32x128xf32, #tpu.memory_space<vmem>>, vector<8x128xf32>
      %c4_i32_35 = arith.constant 4 : i32
      %29 = arith.muli %c0_i32_33, %c4_i32_35 : i32
      %30 = arith.addi %29, %23 : i32
      %31 = arith.index_cast %30 : i32 to index
      %c0_36 = arith.constant 0 : index
      %c0_37 = arith.constant 0 : index
      %32 = vector.load %arg3[%31, %c0_36, %c0_37] : memref<16x8x128xf32, #tpu.memory_space<vmem>>, vector<1x8x128xf32>
      %33 = vector.shape_cast %32 : vector<1x8x128xf32> to vector<8x128xf32>
      %34 = arith.mulf %28, %33 : vector<8x128xf32>
      %35 = arith.addf %24, %34 : vector<8x128xf32>
      %c1_i32_38 = arith.constant 1 : i32
      %c8_i32_39 = arith.constant 8 : i32
      %36 = arith.muli %c1_i32_38, %c8_i32_39 : i32
      %37 = tpu.assume_multiple %36, 8 : i32
      %38 = arith.index_cast %37 : i32 to index
      %c0_40 = arith.constant 0 : index
      %39 = vector.load %arg6[%38, %c0_40] : memref<32x128xf32, #tpu.memory_space<vmem>>, vector<8x128xf32>
      %c4_i32_41 = arith.constant 4 : i32
      %40 = arith.muli %c1_i32_38, %c4_i32_41 : i32
      %41 = arith.addi %40, %23 : i32
      %42 = arith.index_cast %41 : i32 to index
      %c0_42 = arith.constant 0 : index
      %c0_43 = arith.constant 0 : index
      %43 = vector.load %arg3[%42, %c0_42, %c0_43] : memref<16x8x128xf32, #tpu.memory_space<vmem>>, vector<1x8x128xf32>
      %44 = vector.shape_cast %43 : vector<1x8x128xf32> to vector<8x128xf32>
      %45 = arith.mulf %39, %44 : vector<8x128xf32>
      %46 = arith.addf %35, %45 : vector<8x128xf32>
      %c2_i32 = arith.constant 2 : i32
      %c8_i32_44 = arith.constant 8 : i32
      %47 = arith.muli %c2_i32, %c8_i32_44 : i32
      %48 = tpu.assume_multiple %47, 8 : i32
      %49 = arith.index_cast %48 : i32 to index
      %c0_45 = arith.constant 0 : index
      %50 = vector.load %arg6[%49, %c0_45] : memref<32x128xf32, #tpu.memory_space<vmem>>, vector<8x128xf32>
      %c4_i32_46 = arith.constant 4 : i32
      %51 = arith.muli %c2_i32, %c4_i32_46 : i32
      %52 = arith.addi %51, %23 : i32
      %53 = arith.index_cast %52 : i32 to index
      %c0_47 = arith.constant 0 : index
      %c0_48 = arith.constant 0 : index
      %54 = vector.load %arg3[%53, %c0_47, %c0_48] : memref<16x8x128xf32, #tpu.memory_space<vmem>>, vector<1x8x128xf32>
      %55 = vector.shape_cast %54 : vector<1x8x128xf32> to vector<8x128xf32>
      %56 = arith.mulf %50, %55 : vector<8x128xf32>
      %57 = arith.addf %46, %56 : vector<8x128xf32>
      %c3_i32 = arith.constant 3 : i32
      %c8_i32_49 = arith.constant 8 : i32
      %58 = arith.muli %c3_i32, %c8_i32_49 : i32
      %59 = tpu.assume_multiple %58, 8 : i32
      %60 = arith.index_cast %59 : i32 to index
      %c0_50 = arith.constant 0 : index
      %61 = vector.load %arg6[%60, %c0_50] : memref<32x128xf32, #tpu.memory_space<vmem>>, vector<8x128xf32>
      %c4_i32_51 = arith.constant 4 : i32
      %62 = arith.muli %c3_i32, %c4_i32_51 : i32
      %63 = arith.addi %62, %23 : i32
      %64 = arith.index_cast %63 : i32 to index
      %c0_52 = arith.constant 0 : index
      %c0_53 = arith.constant 0 : index
      %65 = vector.load %arg3[%64, %c0_52, %c0_53] : memref<16x8x128xf32, #tpu.memory_space<vmem>>, vector<1x8x128xf32>
      %66 = vector.shape_cast %65 : vector<1x8x128xf32> to vector<8x128xf32>
      %67 = arith.mulf %61, %66 : vector<8x128xf32>
      %68 = arith.addf %57, %67 : vector<8x128xf32>
      %c4_i32_54 = arith.constant 4 : i32
      %69 = vector.extract_strided_slice %68 {offsets = [0, 0], sizes = [8, 64], strides = [1, 1]} : vector<8x128xf32> to vector<8x64xf32>
      %70 = vector.extract_strided_slice %68 {offsets = [0, 64], sizes = [8, 64], strides = [1, 1]} : vector<8x128xf32> to vector<8x64xf32>
      %71 = arith.addf %69, %70 : vector<8x64xf32>
      %c8_i32_55 = arith.constant 8 : i32
      %72 = arith.muli %23, %c8_i32_55 : i32
      %73 = tpu.assume_multiple %72, 8 : i32
      %74 = arith.index_cast %73 : i32 to index
      %c0_56 = arith.constant 0 : index
      %75 = vector.load %arg7[%74, %c0_56] : memref<32x64xf32, #tpu.memory_space<vmem>>, vector<8x64xf32>
      tpu.vector_store %arg7[%74, %c0_56], %71 {strides = array<i32>} : memref<32x64xf32, #tpu.memory_space<vmem>>, vector<8x64xf32>,
    }
    %c4_i32_23 = arith.constant 4 : i32
    %c0_24 = arith.constant 0 : index
    %c0_25 = arith.constant 0 : index
    %17 = vector.load %arg7[%c0_24, %c0_25] : memref<32x64xf32, #tpu.memory_space<vmem>>, vector<32x64xf32>
    %cst_26 = arith.constant dense<0.000000e+00> : vector<32x64xf32>
    %18 = tpu.matmul %17, %1, %cst_26 {dimension_numbers = #tpu.dot_dimension_numbers<[1], [0], [0], [1], [0, 0, 1, 1], [], []>} : vector<32x64xf32>, vector<64x64xf32>, vector<32x64xf32> -> vector<32x64xf32>
    %c1_27 = arith.constant 1 : index
    %c0_28 = arith.constant 0 : index
    %c0_29 = arith.constant 0 : index
    %19 = vector.load %arg5[%c1_27, %c0_28, %c0_29] : memref<2x32x64xf32, #tpu.memory_space<vmem>>, vector<1x32x64xf32>
    %20 = vector.shape_cast %19 : vector<1x32x64xf32> to vector<32x64xf32>
    %21 = vector.shape_cast %18 : vector<32x64xf32> to vector<1x32x64xf32>
    tpu.vector_store %arg5[%c1_27, %c0_28, %c0_29], %21 {strides = array<i32>} : memref<2x32x64xf32, #tpu.memory_space<vmem>>, vector<1x32x64xf32>,
    return
  }
  func.func @transform_0(%arg0: i32) -> (i32, i32, i32) {
    %c0_i32 = arith.constant 0 : i32
    %c0_i32_0 = arith.constant 0 : i32
    %c0_i32_1 = arith.constant 0 : i32
    return %arg0, %c0_i32, %c0_i32_0 : i32, i32, i32
  }
  func.func @transform_1(%arg0: i32) -> (i32, i32) {
    %c0_i32 = arith.constant 0 : i32
    %c0_i32_0 = arith.constant 0 : i32
    %c0_i32_1 = arith.constant 0 : i32
    return %c0_i32, %c0_i32_0 : i32, i32
  }
  func.func @transform_2(%arg0: i32) -> (i32, i32, i32) {
    %c0_i32 = arith.constant 0 : i32
    %c0_i32_0 = arith.constant 0 : i32
    %c0_i32_1 = arith.constant 0 : i32
    %c0_i32_2 = arith.constant 0 : i32
    return %c0_i32, %c0_i32_0, %c0_i32_1 : i32, i32, i32
  }
  func.func @transform_3(%arg0: i32) -> (i32, i32) {
    %c0_i32 = arith.constant 0 : i32
    %c0_i32_0 = arith.constant 0 : i32
    %c0_i32_1 = arith.constant 0 : i32
    return %c0_i32, %c0_i32_0 : i32, i32
  }
  func.func @transform_4(%arg0: i32) -> (i32, i32, i32) {
    %c0_i32 = arith.constant 0 : i32
    %c0_i32_0 = arith.constant 0 : i32
    %c0_i32_1 = arith.constant 0 : i32
    return %arg0, %c0_i32, %c0_i32_0 : i32, i32, i32
  }
}

</mosaic_0001>

<llo_original>
// kernel: spectral_conv1d_apply.1
$region0: #{spectral_conv1d_apply.1}
  #allocation0 [shape = 'u32[]', space=smem, size = 0x4, offset = 0x4, fixed_abs, tag = 'smem constant byte address 0x4 - core index']
  #allocation1 [shape = 'u32[144,128]{1,0:T(1,128)}', space=vmem, size = 0x12000, scoped, tag = 'internal scratch']
  #allocation2 [shape = 'f32[32,128]{1,0:T(8,128)}', space=vmem, size = 0x4000, scoped, tag = 'scratch operand']
  #allocation3 [shape = 'f32[32,64]{1,0:T(8,128)}', space=vmem, size = 0x4000, scoped, tag = 'scratch operand']
  %s0 = inlined_call_operand.vmem [shape: f32[2,32,64], index: 0, kind: input, shape index: {}]
  %s1 = inlined_call_operand.hbm [shape: f32[64,128], index: 1, kind: input, shape index: {}]
  %s2 = inlined_call_operand.vmem [shape: f32[16,8,128], index: 2, kind: input, shape index: {}]
  %s3 = inlined_call_operand.hbm [shape: f32[64,64], index: 3, kind: input, shape index: {}]
  %s4 = inlined_call_operand.vmem [shape: f32[2,32,64], index: 4, kind: output, shape index: {}]
  %s5 = sld [smem:[#allocation0]]
  $region48: #{spectral_conv1d_apply.1} parent=0
    _
  %s7 = ssub.s32 1, %s5
  %s8 = scalar_select 0, %s7, %s5
  $region1: #{spectral_conv1d_apply.1} parent=0
    #allocation4 [shape = 'u8[32768]{0}', space=vmem, size = 0x8000, scoped, tag = 'input window, operand 1, single buffered']
    #allocation5 [shape = 's32[1]{0}', space=sflag, size = 0x4, scoped, tag = 'scoped memory for spectral_conv1d_apply.1']
    #allocation6 [shape = 'u8[32768]{0}', space=vmem, size = 0x8000, scoped, tag = 'input window, operand 3, single buffered']
    #allocation7 [shape = 's32[1]{0}', space=sflag, size = 0x4, scoped, tag = 'scoped memory for spectral_conv1d_apply.1']
    %9 = vsyncpa [#allocation5], 0
    %10 = vsyncpa [#allocation7], 0
    // Predicated region
    $region2: #{spectral_conv1d_apply.1} parent=1 // pred_check
      _
    $region3: #{spectral_conv1d_apply.1} parent=1 // pred_check_branch
      %12 = sbr.rel (0) target = $region5
    $region4: #{spectral_conv1d_apply.1} parent=1 // pred_region
      _
    $region5: #{spectral_conv1d_apply.1} parent=1 // pred_fallthru
      _
    // Predicated region
    $region6: #{spectral_conv1d_apply.1} parent=1 // pred_check
      _
    $region7: #{spectral_conv1d_apply.1} parent=1 // pred_check_branch
      %14 = sbr.rel (0) target = $region9
    $region8: #{spectral_conv1d_apply.1} parent=1 // pred_region
      %s16 = ssub.s32 1024, 1024
      %17 = vsyncadd [#allocation5], %s16
      %s18 = sshll.u32 [#allocation4], 4
      %s19 = int_to_ptr.vmem [resolvable:$true] %s18
      %24 = dma.hbm_to_vmem [thread:$0]  %s1, 1024, %s19, [#allocation5], 128, 128, 8
    $region9: #{spectral_conv1d_apply.1} parent=1 // pred_fallthru
      _
    // Predicated region
    $region10: #{spectral_conv1d_apply.1} parent=1 // pred_check
      _
    $region11: #{spectral_conv1d_apply.1} parent=1 // pred_check_branch
      %26 = sbr.rel (0) target = $region13
    $region12: #{spectral_conv1d_apply.1} parent=1 // pred_region
      _
    $region13: #{spectral_conv1d_apply.1} parent=1 // pred_fallthru
      _
    // Predicated region
    $region14: #{spectral_conv1d_apply.1} parent=1 // pred_check
      _
    $region15: #{spectral_conv1d_apply.1} parent=1 // pred_check_branch
      %28 = sbr.rel (0) target = $region17
    $region16: #{spectral_conv1d_apply.1} parent=1 // pred_region
      %s30 = ssub.s32 1024, 1024
      %31 = vsyncadd [#allocation7], %s30
      %s32 = sshll.u32 [#allocation6], 4
      %s33 = int_to_ptr.vmem [resolvable:$true] %s32
      %38 = dma.hbm_to_vmem [thread:$0]  %s3, 1024, %s33, [#allocation7], 128, 128, 8
    $region17: #{spectral_conv1d_apply.1} parent=1 // pred_fallthru
      _
    // Predicated region
    $region18: #{spectral_conv1d_apply.1} parent=1 // pred_check
      _
    $region19: #{spectral_conv1d_apply.1} parent=1 // pred_check_branch
      %40 = sbr.rel (0) target = $region21
    $region20: #{spectral_conv1d_apply.1} parent=1 // pred_region
      %41 = dma.done [#allocation5], 1024
    $region21: #{spectral_conv1d_apply.1} parent=1 // pred_fallthru
      _
    // Predicated region
    $region22: #{spectral_conv1d_apply.1} parent=1 // pred_check
      _
    $region23: #{spectral_conv1d_apply.1} parent=1 // pred_check_branch
      %43 = sbr.rel (0) target = $region25
    $region24: #{spectral_conv1d_apply.1} parent=1 // pred_region
      %44 = dma.done [#allocation7], 1024
    $region25: #{spectral_conv1d_apply.1} parent=1 // pred_fallthru
      _
    %v45 = vld [vmem:[#allocation4] sm:$0xff]
    %v46 = vld [vmem:[#allocation4 + $0x8] sm:$0xff]
    %v47 = vld [vmem:[#allocation4 + $0x10] sm:$0xff]
    %v48 = vld [vmem:[#allocation4 + $0x18] sm:$0xff]
    %v49 = vld [vmem:[#allocation4 + $0x20] sm:$0xff]
    %v50 = vld [vmem:[#allocation4 + $0x28] sm:$0xff]
    %v51 = vld [vmem:[#allocation4 + $0x30] sm:$0xff]
    %v52 = vld [vmem:[#allocation4 + $0x38] sm:$0xff]
    %v53 = vld [vmem:[#allocation6] sm:$0xff]
    %v54 = vld [vmem:[#allocation6 + $0x8] sm:$0xff]
    %v55 = vld [vmem:[#allocation6 + $0x10] sm:$0xff]
    %v56 = vld [vmem:[#allocation6 + $0x18] sm:$0xff]
    %v57 = vld [vmem:[#allocation6 + $0x20] sm:$0xff]
    %v58 = vld [vmem:[#allocation6 + $0x28] sm:$0xff]
    %v59 = vld [vmem:[#allocation6 + $0x30] sm:$0xff]
    %v60 = vld [vmem:[#allocation6 + $0x38] sm:$0xff]
    %v61 = vld [vmem:[%s0] sm:$0xff]
    %v62 = vld [vmem:[%s0 + $0x8] sm:$0xff]
    %v63 = vld [vmem:[%s0 + $0x10] sm:$0xff]
    %v64 = vld [vmem:[%s0 + $0x18] sm:$0xff]
    %vm65 = vcmask 523264
    %v67 = vsel %vm65, %v61, 0
    %v70 = vsel %vm65, %v62, 0
    %v73 = vsel %vm65, %v63, 0
    %v76 = vsel %vm65, %v64, 0
    %78 = vmatprep.subr.mxu0 0.0
    %79 = vmatpush1.msra.mxu0 %v45
    %80 = vmatprep.subr.mxu0 0.0
    %81 = vmatpush1.msra.mxu0 %v46
    %82 = vmatprep.subr.mxu0 0.0
    %83 = vmatpush1.msra.mxu0 %v47
    %84 = vmatprep.subr.mxu0 0.0
    %85 = vmatpush1.msra.mxu0 %v48
    %86 = vmatprep.subr.mxu0 0.0
    %87 = vmatpush1.msra.mxu0 %v49
    %88 = vmatprep.subr.mxu0 0.0
    %89 = vmatpush1.msra.mxu0 %v50
    %90 = vmatprep.subr.mxu0 0.0
    %91 = vmatpush1.msra.mxu0 %v51
    %92 = vmatprep.subr.mxu0 0.0
    %93 = vmatpush1.msra.mxu0 %v52
    %94 = vmatprep.subr.mxu0 0.0
    %95 = vmatpush1.msra.mxu0 0.0
    %96 = vmatprep.subr.mxu0 0.0
    %97 = vmatpush1.msra.mxu0 0.0
    %98 = vmatprep.subr.mxu0 0.0
    %99 = vmatpush1.msra.mxu0 0.0
    %100 = vmatprep.subr.mxu0 0.0
    %101 = vmatpush1.msra.mxu0 0.0
    %102 = vmatprep.subr.mxu0 0.0
    %103 = vmatpush1.msra.mxu0 0.0
    %104 = vmatprep.subr.mxu0 0.0
    %105 = vmatpush1.msra.mxu0 0.0
    %106 = vmatprep.subr.mxu0 0.0
    %107 = vmatpush1.msra.mxu0 0.0
    %108 = vmatprep.subr.mxu0 0.0
    %109 = vmatpush1.msra.mxu0 0.0
    %110 = vmatprep.subr.mxu0 0.0
    %111 = vmatpush1.msra.mxu0 0.0
    %112 = vmatprep.subr.mxu0 0.0
    %113 = vmatpush1.msra.mxu0 0.0
    %114 = vmatprep.subr.mxu0 0.0
    %115 = vmatpush1.msra.mxu0 0.0
    %116 = vmatprep.subr.mxu0 0.0
    %117 = vmatpush1.msra.mxu0 0.0
    %118 = vmatprep.subr.mxu0 0.0
    %119 = vmatpush1.msra.mxu0 0.0
    %120 = vmatprep.subr.mxu0 0.0
    %121 = vmatpush1.msra.mxu0 0.0
    %122 = vmatprep.subr.mxu0 0.0
    %123 = vmatpush1.msra.mxu0 0.0
    %124 = vmatprep.subr.mxu0 0.0
    %125 = vmatpush1.msra.mxu0 0.0
    %126 = vmatprep.subr.mxu0 0.0
    %127 = vmatpush1.msra.mxu0 0.0
    %128 = vmatprep.subr.mxu0 0.0
    %129 = vmatpush1.msra.mxu0 0.0
    %130 = vmatprep.subr.mxu0 0.0
    %131 = vmatpush1.msra.mxu0 0.0
    %132 = vmatprep.subr.mxu0 0.0
    %133 = vmatpush1.msra.mxu0 0.0
    %134 = vmatprep.subr.mxu0 0.0
    %135 = vmatpush1.msra.mxu0 0.0
    %136 = vmatprep.subr.mxu0 0.0
    %137 = vmatpush1.msra.mxu0 0.0
    %138 = vmatprep.subr.mxu0 0.0
    %139 = vmatpush1.msra.mxu0 0.0
    %140 = vmatprep.subr.mxu0 0.0
    %141 = vmatpush1.msra.mxu0 0.0
    %142 = vmatprep.mubr.f32.mxu0 0.0
    %143 = vmatmul.mubr.f32.gmra.mrb[0].mxu0 %v67
    %v144 = vpop.f32.mrb[0].mxu0
    %v145 = vadd.f32 0.0, %v144
    %v146 = vpop.f32.mrb[0].mxu0
    %147 = vmatprep.mubr.f32.mxu0 0.0
    %148 = vmatmul.mubr.f32.gmra.mrb[0].mxu0 %v70
    %v149 = vpop.f32.mrb[0].mxu0
    %v150 = vadd.f32 0.0, %v149
    %v151 = vpop.f32.mrb[0].mxu0
    %152 = vmatprep.mubr.f32.mxu0 0.0
    %153 = vmatmul.mubr.f32.gmra.mrb[0].mxu0 %v73
    %v154 = vpop.f32.mrb[0].mxu0
    %v155 = vadd.f32 0.0, %v154
    %v156 = vpop.f32.mrb[0].mxu0
    %157 = vmatprep.mubr.f32.mxu0 0.0
    %158 = vmatmul.mubr.f32.gmra.mrb[0].mxu0 %v76
    %v159 = vpop.f32.mrb[0].mxu0
    %v160 = vadd.f32 0.0, %v159
    %v161 = vpop.f32.mrb[0].mxu0
    %162 = vdwg.mxu0
    %163 = vst [vmem:[#allocation2] sm:$0xff] %v145
    %164 = vst [vmem:[#allocation2 + $0x8] sm:$0xff] %v150
    %165 = vst [vmem:[#allocation2 + $0x10] sm:$0xff] %v155
    %166 = vst [vmem:[#allocation2 + $0x18] sm:$0xff] %v160
    loop: start=0, step=1, limit=4
    $region26: #{spectral_conv1d_apply.1} parent=1 // loop_pre_header
      _
    $region27: #{spectral_conv1d_apply.1} parent=1 // loop_header
      %s168 = sphi 0, %s172
      %p169 = scmp.ge.s32.totalorder %s168, 4
    $region28: #{spectral_conv1d_apply.1} parent=1 // loop_header_branch
      %171 = sbr.rel (%p169) target = $region32
    $region29: #{spectral_conv1d_apply.1} parent=1 // loop_body
      %v173 = vld [vmem:[#allocation2] sm:$0xff]
      %s174 = smul.u32 %s168, 8
      %s175 = scalar_lea.vmem %s2, %s174
      %v176 = vld [vmem:[%s175] sm:$0xff]
      %v177 = vmul.f32 %v173, %v176
      %v178 = vadd.f32 %v177, 0.0
      %s179 = scalar_lea.vmem [#allocation2], 8
      %v180 = vld [vmem:[%s179] sm:$0xff]
      %s181 = sadd.s32 %s168, 4
      %s182 = smul.u32 %s181, 8
      %s183 = scalar_lea.vmem %s2, %s182
      %v184 = vld [vmem:[%s183] sm:$0xff]
      %v185 = vmul.f32 %v180, %v184
      %v186 = vadd.f32 %v178, %v185
      %s187 = scalar_lea.vmem [#allocation2], 16
      %v188 = vld [vmem:[%s187] sm:$0xff]
      %s189 = sadd.s32 %s168, 8
      %s190 = smul.u32 %s189, 8
      %s191 = scalar_lea.vmem %s2, %s190
      %v192 = vld [vmem:[%s191] sm:$0xff]
      %v193 = vmul.f32 %v188, %v192
      %v194 = vadd.f32 %v186, %v193
      %s195 = scalar_lea.vmem [#allocation2], 24
      %v196 = vld [vmem:[%s195] sm:$0xff]
      %s197 = sadd.s32 %s168, 12
      %s198 = smul.u32 %s197, 8
      %s199 = scalar_lea.vmem %s2, %s198
      %v200 = vld [vmem:[%s199] sm:$0xff]
      %v201 = vmul.f32 %v196, %v200
      %v202 = vadd.f32 %v194, %v201
      %204 = vrot.lane.b32.xlu0 %v202, 64
      %v205 = vpop.permute.xlu0 %204
      %v207 = vadd.f32 %v202, %v205
      %s208 = scalar_lea.vmem [#allocation3], %s174
      %209 = vst.msk [vmem:[%s208] sm:$0xff] %vm65, %v207
    $region30: #{spectral_conv1d_apply.1} parent=1 // loop_footer
      %s172 = sadd.s32 1, %s168
    $region31: #{spectral_conv1d_apply.1} parent=1 // loop_footer_branch
      %167 = sbr.rel target = $region27
    $region32: #{spectral_conv1d_apply.1} parent=1 // loop_exit
      _
    %v210 = vld [vmem:[#allocation3] sm:$0xff]
    %v211 = vld [vmem:[#allocation3 + $0x8] sm:$0xff]
    %v212 = vld [vmem:[#allocation3 + $0x10] sm:$0xff]
    %v213 = vld [vmem:[#allocation3 + $0x18] sm:$0xff]
    %v215 = vsel %vm65, %v210, 0
    %v218 = vsel %vm65, %v211, 0
    %v221 = vsel %vm65, %v212, 0
    %v224 = vsel %vm65, %v213, 0
    %226 = vmatprep.subr.mxu0 0.0
    %227 = vmatpush1.msra.mxu0 %v53
    %228 = vmatprep.subr.mxu0 0.0
    %229 = vmatpush1.msra.mxu0 %v54
    %230 = vmatprep.subr.mxu0 0.0
    %231 = vmatpush1.msra.mxu0 %v55
    %232 = vmatprep.subr.mxu0 0.0
    %233 = vmatpush1.msra.mxu0 %v56
    %234 = vmatprep.subr.mxu0 0.0
    %235 = vmatpush1.msra.mxu0 %v57
    %236 = vmatprep.subr.mxu0 0.0
    %237 = vmatpush1.msra.mxu0 %v58
    %238 = vmatprep.subr.mxu0 0.0
    %239 = vmatpush1.msra.mxu0 %v59
    %240 = vmatprep.subr.mxu0 0.0
    %241 = vmatpush1.msra.mxu0 %v60
    %242 = vmatprep.subr.mxu0 0.0
    %243 = vmatpush1.msra.mxu0 0.0
    %244 = vmatprep.subr.mxu0 0.0
    %245 = vmatpush1.msra.mxu0 0.0
    %246 = vmatprep.subr.mxu0 0.0
    %247 = vmatpush1.msra.mxu0 0.0
    %248 = vmatprep.subr.mxu0 0.0
    %249 = vmatpush1.msra.mxu0 0.0
    %250 = vmatprep.subr.mxu0 0.0
    %251 = vmatpush1.msra.mxu0 0.0
    %252 = vmatprep.subr.mxu0 0.0
    %253 = vmatpush1.msra.mxu0 0.0
    %254 = vmatprep.subr.mxu0 0.0
    %255 = vmatpush1.msra.mxu0 0.0
    %256 = vmatprep.subr.mxu0 0.0
    %257 = vmatpush1.msra.mxu0 0.0
    %258 = vmatprep.subr.mxu0 0.0
    %259 = vmatpush1.msra.mxu0 0.0
    %260 = vmatprep.subr.mxu0 0.0
    %261 = vmatpush1.msra.mxu0 0.0
    %262 = vmatprep.subr.mxu0 0.0
    %263 = vmatpush1.msra.mxu0 0.0
    %264 = vmatprep.subr.mxu0 0.0
    %265 = vmatpush1.msra.mxu0 0.0
    %266 = vmatprep.subr.mxu0 0.0
    %267 = vmatpush1.msra.mxu0 0.0
    %268 = vmatprep.subr.mxu0 0.0
    %269 = vmatpush1.msra.mxu0 0.0
    %270 = vmatprep.subr.mxu0 0.0
    %271 = vmatpush1.msra.mxu0 0.0
    %272 = vmatprep.subr.mxu0 0.0
    %273 = vmatpush1.msra.mxu0 0.0
    %274 = vmatprep.subr.mxu0 0.0
    %275 = vmatpush1.msra.mxu0 0.0
    %276 = vmatprep.subr.mxu0 0.0
    %277 = vmatpush1.msra.mxu0 0.0
    %278 = vmatprep.subr.mxu0 0.0
    %279 = vmatpush1.msra.mxu0 0.0
    %280 = vmatprep.subr.mxu0 0.0
    %281 = vmatpush1.msra.mxu0 0.0
    %282 = vmatprep.subr.mxu0 0.0
    %283 = vmatpush1.msra.mxu0 0.0
    %284 = vmatprep.subr.mxu0 0.0
    %285 = vmatpush1.msra.mxu0 0.0
    %286 = vmatprep.subr.mxu0 0.0
    %287 = vmatpush1.msra.mxu0 0.0
    %288 = vmatprep.subr.mxu0 0.0
    %289 = vmatpush1.msra.mxu0 0.0
    %290 = vmatprep.mubr.f32.mxu0 0.0
    %291 = vmatmul.mubr.f32.gmra.mrb[0].mxu0 %v215
    %v292 = vpop.f32.mrb[0].mxu0
    %v293 = vadd.f32 0.0, %v292
    %v294 = vpop.f32.mrb[0].mxu0
    %295 = vmatprep.mubr.f32.mxu0 0.0
    %296 = vmatmul.mubr.f32.gmra.mrb[0].mxu0 %v218
    %v297 = vpop.f32.mrb[0].mxu0
    %v298 = vadd.f32 0.0, %v297
    %v299 = vpop.f32.mrb[0].mxu0
    %300 = vmatprep.mubr.f32.mxu0 0.0
    %301 = vmatmul.mubr.f32.gmra.mrb[0].mxu0 %v221
    %v302 = vpop.f32.mrb[0].mxu0
    %v303 = vadd.f32 0.0, %v302
    %v304 = vpop.f32.mrb[0].mxu0
    %305 = vmatprep.mubr.f32.mxu0 0.0
    %306 = vmatmul.mubr.f32.gmra.mrb[0].mxu0 %v224
    %v307 = vpop.f32.mrb[0].mxu0
    %v308 = vadd.f32 0.0, %v307
    %v309 = vpop.f32.mrb[0].mxu0
    %310 = vdwg.mxu0
    %311 = vst.msk [vmem:[%s4] sm:$0xff] %vm65, %v293
    %312 = vst.msk [vmem:[%s4 + $0x8] sm:$0xff] %vm65, %v298
    %313 = vst.msk [vmem:[%s4 + $0x10] sm:$0xff] %vm65, %v303
    %314 = vst.msk [vmem:[%s4 + $0x18] sm:$0xff] %vm65, %v308
    %s315 = scalar_lea.vmem %s0, 32
    %v316 = vld [vmem:[%s315] sm:$0xff]
    %v317 = vld [vmem:[%s315 + $0x8] sm:$0xff]
    %v318 = vld [vmem:[%s315 + $0x10] sm:$0xff]
    %v319 = vld [vmem:[%s315 + $0x18] sm:$0xff]
    %v321 = vsel %vm65, %v316, 0
    %v324 = vsel %vm65, %v317, 0
    %v327 = vsel %vm65, %v318, 0
    %v330 = vsel %vm65, %v319, 0
    %332 = vmatprep.subr.mxu0 0.0
    %333 = vmatpush1.msra.mxu0 %v45
    %334 = vmatprep.subr.mxu0 0.0
    %335 = vmatpush1.msra.mxu0 %v46
    %336 = vmatprep.subr.mxu0 0.0
    %337 = vmatpush1.msra.mxu0 %v47
    %338 = vmatprep.subr.mxu0 0.0
    %339 = vmatpush1.msra.mxu0 %v48
    %340 = vmatprep.subr.mxu0 0.0
    %341 = vmatpush1.msra.mxu0 %v49
    %342 = vmatprep.subr.mxu0 0.0
    %343 = vmatpush1.msra.mxu0 %v50
    %344 = vmatprep.subr.mxu0 0.0
    %345 = vmatpush1.msra.mxu0 %v51
    %346 = vmatprep.subr.mxu0 0.0
    %347 = vmatpush1.msra.mxu0 %v52
    %348 = vmatprep.subr.mxu0 0.0
    %349 = vmatpush1.msra.mxu0 0.0
    %350 = vmatprep.subr.mxu0 0.0
    %351 = vmatpush1.msra.mxu0 0.0
    %352 = vmatprep.subr.mxu0 0.0
    %353 = vmatpush1.msra.mxu0 0.0
    %354 = vmatprep.subr.mxu0 0.0
    %355 = vmatpush1.msra.mxu0 0.0
    %356 = vmatprep.subr.mxu0 0.0
    %357 = vmatpush1.msra.mxu0 0.0
    %358 = vmatprep.subr.mxu0 0.0
    %359 = vmatpush1.msra.mxu0 0.0
    %360 = vmatprep.subr.mxu0 0.0
    %361 = vmatpush1.msra.mxu0 0.0
    %362 = vmatprep.subr.mxu0 0.0
    %363 = vmatpush1.msra.mxu0 0.0
    %364 = vmatprep.subr.mxu0 0.0
    %365 = vmatpush1.msra.mxu0 0.0
    %366 = vmatprep.subr.mxu0 0.0
    %367 = vmatpush1.msra.mxu0 0.0
    %368 = vmatprep.subr.mxu0 0.0
    %369 = vmatpush1.msra.mxu0 0.0
    %370 = vmatprep.subr.mxu0 0.0
    %371 = vmatpush1.msra.mxu0 0.0
    %372 = vmatprep.subr.mxu0 0.0
    %373 = vmatpush1.msra.mxu0 0.0
    %374 = vmatprep.subr.mxu0 0.0
    %375 = vmatpush1.msra.mxu0 0.0
    %376 = vmatprep.subr.mxu0 0.0
    %377 = vmatpush1.msra.mxu0 0.0
    %378 = vmatprep.subr.mxu0 0.0
    %379 = vmatpush1.msra.mxu0 0.0
    %380 = vmatprep.subr.mxu0 0.0
    %381 = vmatpush1.msra.mxu0 0.0
    %382 = vmatprep.subr.mxu0 0.0
    %383 = vmatpush1.msra.mxu0 0.0
    %384 = vmatprep.subr.mxu0 0.0
    %385 = vmatpush1.msra.mxu0 0.0
    %386 = vmatprep.subr.mxu0 0.0
    %387 = vmatpush1.msra.mxu0 0.0
    %388 = vmatprep.subr.mxu0 0.0
    %389 = vmatpush1.msra.mxu0 0.0
    %390 = vmatprep.subr.mxu0 0.0
    %391 = vmatpush1.msra.mxu0 0.0
    %392 = vmatprep.subr.mxu0 0.0
    %393 = vmatpush1.msra.mxu0 0.0
    %394 = vmatprep.subr.mxu0 0.0
    %395 = vmatpush1.msra.mxu0 0.0
    %396 = vmatprep.mubr.f32.mxu0 0.0
    %397 = vmatmul.mubr.f32.gmra.mrb[0].mxu0 %v321
    %v398 = vpop.f32.mrb[0].mxu0
    %v399 = vadd.f32 0.0, %v398
    %v400 = vpop.f32.mrb[0].mxu0
    %401 = vmatprep.mubr.f32.mxu0 0.0
    %402 = vmatmul.mubr.f32.gmra.mrb[0].mxu0 %v324
    %v403 = vpop.f32.mrb[0].mxu0
    %v404 = vadd.f32 0.0, %v403
    %v405 = vpop.f32.mrb[0].mxu0
    %406 = vmatprep.mubr.f32.mxu0 0.0
    %407 = vmatmul.mubr.f32.gmra.mrb[0].mxu0 %v327
    %v408 = vpop.f32.mrb[0].mxu0
    %v409 = vadd.f32 0.0, %v408
    %v410 = vpop.f32.mrb[0].mxu0
    %411 = vmatprep.mubr.f32.mxu0 0.0
    %412 = vmatmul.mubr.f32.gmra.mrb[0].mxu0 %v330
    %v413 = vpop.f32.mrb[0].mxu0
    %v414 = vadd.f32 0.0, %v413
    %v415 = vpop.f32.mrb[0].mxu0
    %416 = vdwg.mxu0
    %417 = vst [vmem:[#allocation2] sm:$0xff] %v399
    %418 = vst [vmem:[#allocation2 + $0x8] sm:$0xff] %v404
    %419 = vst [vmem:[#allocation2 + $0x10] sm:$0xff] %v409
    %420 = vst [vmem:[#allocation2 + $0x18] sm:$0xff] %v414
    loop: start=0, step=1, limit=4
    $region33: #{spectral_conv1d_apply.1} parent=1 // loop_pre_header
      _
    $region34: #{spectral_conv1d_apply.1} parent=1 // loop_header
      %s422 = sphi 0, %s426
      %p423 = scmp.ge.s32.totalorder %s422, 4
    $region35: #{spectral_conv1d_apply.1} parent=1 // loop_header_branch
      %425 = sbr.rel (%p423) target = $region39
    $region36: #{spectral_conv1d_apply.1} parent=1 // loop_body
      %v427 = vld [vmem:[#allocation2] sm:$0xff]
      %s428 = smul.u32 %s422, 8
      %s429 = scalar_lea.vmem %s2, %s428
      %v430 = vld [vmem:[%s429] sm:$0xff]
      %v431 = vmul.f32 %v427, %v430
      %v432 = vadd.f32 %v431, 0.0
      %s433 = scalar_lea.vmem [#allocation2], 8
      %v434 = vld [vmem:[%s433] sm:$0xff]
      %s435 = sadd.s32 %s422, 4
      %s436 = smul.u32 %s435, 8
      %s437 = scalar_lea.vmem %s2, %s436
      %v438 = vld [vmem:[%s437] sm:$0xff]
      %v439 = vmul.f32 %v434, %v438
      %v440 = vadd.f32 %v432, %v439
      %s441 = scalar_lea.vmem [#allocation2], 16
      %v442 = vld [vmem:[%s441] sm:$0xff]
      %s443 = sadd.s32 %s422, 8
      %s444 = smul.u32 %s443, 8
      %s445 = scalar_lea.vmem %s2, %s444
      %v446 = vld [vmem:[%s445] sm:$0xff]
      %v447 = vmul.f32 %v442, %v446
      %v448 = vadd.f32 %v440, %v447
      %s449 = scalar_lea.vmem [#allocation2], 24
      %v450 = vld [vmem:[%s449] sm:$0xff]
      %s451 = sadd.s32 %s422, 12
      %s452 = smul.u32 %s451, 8
      %s453 = scalar_lea.vmem %s2, %s452
      %v454 = vld [vmem:[%s453] sm:$0xff]
      %v455 = vmul.f32 %v450, %v454
      %v456 = vadd.f32 %v448, %v455
      %458 = vrot.lane.b32.xlu0 %v456, 64
      %v459 = vpop.permute.xlu0 %458
      %v461 = vadd.f32 %v456, %v459
      %s462 = scalar_lea.vmem [#allocation3], %s428
      %463 = vst.msk [vmem:[%s462] sm:$0xff] %vm65, %v461
    $region37: #{spectral_conv1d_apply.1} parent=1 // loop_footer
      %s426 = sadd.s32 1, %s422
    $region38: #{spectral_conv1d_apply.1} parent=1 // loop_footer_branch
      %421 = sbr.rel target = $region34
    $region39: #{spectral_conv1d_apply.1} parent=1 // loop_exit
      _
    %v464 = vld [vmem:[#allocation3] sm:$0xff]
    %v465 = vld [vmem:[#allocation3 + $0x8] sm:$0xff]
    %v466 = vld [vmem:[#allocation3 + $0x10] sm:$0xff]
    %v467 = vld [vmem:[#allocation3 + $0x18] sm:$0xff]
    %v469 = vsel %vm65, %v464, 0
    %v472 = vsel %vm65, %v465, 0
    %v475 = vsel %vm65, %v466, 0
    %v478 = vsel %vm65, %v467, 0
    %480 = vmatprep.subr.mxu0 0.0
    %481 = vmatpush1.msra.mxu0 %v53
    %482 = vmatprep.subr.mxu0 0.0
    %483 = vmatpush1.msra.mxu0 %v54
    %484 = vmatprep.subr.mxu0 0.0
    %485 = vmatpush1.msra.mxu0 %v55
    %486 = vmatprep.subr.mxu0 0.0
    %487 = vmatpush1.msra.mxu0 %v56
    %488 = vmatprep.subr.mxu0 0.0
    %489 = vmatpush1.msra.mxu0 %v57
    %490 = vmatprep.subr.mxu0 0.0
    %491 = vmatpush1.msra.mxu0 %v58
    %492 = vmatprep.subr.mxu0 0.0
    %493 = vmatpush1.msra.mxu0 %v59
    %494 = vmatprep.subr.mxu0 0.0
    %495 = vmatpush1.msra.mxu0 %v60
    %496 = vmatprep.subr.mxu0 0.0
    %497 = vmatpush1.msra.mxu0 0.0
    %498 = vmatprep.subr.mxu0 0.0
    %499 = vmatpush1.msra.mxu0 0.0
    %500 = vmatprep.subr.mxu0 0.0
    %501 = vmatpush1.msra.mxu0 0.0
    %502 = vmatprep.subr.mxu0 0.0
    %503 = vmatpush1.msra.mxu0 0.0
    %504 = vmatprep.subr.mxu0 0.0
    %505 = vmatpush1.msra.mxu0 0.0
    %506 = vmatprep.subr.mxu0 0.0
    %507 = vmatpush1.msra.mxu0 0.0
    %508 = vmatprep.subr.mxu0 0.0
    %509 = vmatpush1.msra.mxu0 0.0
    %510 = vmatprep.subr.mxu0 0.0
    %511 = vmatpush1.msra.mxu0 0.0
    %512 = vmatprep.subr.mxu0 0.0
    %513 = vmatpush1.msra.mxu0 0.0
    %514 = vmatprep.subr.mxu0 0.0
    %515 = vmatpush1.msra.mxu0 0.0
    %516 = vmatprep.subr.mxu0 0.0
    %517 = vmatpush1.msra.mxu0 0.0
    %518 = vmatprep.subr.mxu0 0.0
    %519 = vmatpush1.msra.mxu0 0.0
    %520 = vmatprep.subr.mxu0 0.0
    %521 = vmatpush1.msra.mxu0 0.0
    %522 = vmatprep.subr.mxu0 0.0
    %523 = vmatpush1.msra.mxu0 0.0
    %524 = vmatprep.subr.mxu0 0.0
    %525 = vmatpush1.msra.mxu0 0.0
    %526 = vmatprep.subr.mxu0 0.0
    %527 = vmatpush1.msra.mxu0 0.0
    %528 = vmatprep.subr.mxu0 0.0
    %529 = vmatpush1.msra.mxu0 0.0
    %530 = vmatprep.subr.mxu0 0.0
    %531 = vmatpush1.msra.mxu0 0.0
    %532 = vmatprep.subr.mxu0 0.0
    %533 = vmatpush1.msra.mxu0 0.0
    %534 = vmatprep.subr.mxu0 0.0
    %535 = vmatpush1.msra.mxu0 0.0
    %536 = vmatprep.subr.mxu0 0.0
    %537 = vmatpush1.msra.mxu0 0.0
    %538 = vmatprep.subr.mxu0 0.0
    %539 = vmatpush1.msra.mxu0 0.0
    %540 = vmatprep.subr.mxu0 0.0
    %541 = vmatpush1.msra.mxu0 0.0
    %542 = vmatprep.subr.mxu0 0.0
    %543 = vmatpush1.msra.mxu0 0.0
    %544 = vmatprep.mubr.f32.mxu0 0.0
    %545 = vmatmul.mubr.f32.gmra.mrb[0].mxu0 %v469
    %v546 = vpop.f32.mrb[0].mxu0
    %v547 = vadd.f32 0.0, %v546
    %v548 = vpop.f32.mrb[0].mxu0
    %549 = vmatprep.mubr.f32.mxu0 0.0
    %550 = vmatmul.mubr.f32.gmra.mrb[0].mxu0 %v472
    %v551 = vpop.f32.mrb[0].mxu0
    %v552 = vadd.f32 0.0, %v551
    %v553 = vpop.f32.mrb[0].mxu0
    %554 = vmatprep.mubr.f32.mxu0 0.0
    %555 = vmatmul.mubr.f32.gmra.mrb[0].mxu0 %v475
    %v556 = vpop.f32.mrb[0].mxu0
    %v557 = vadd.f32 0.0, %v556
    %v558 = vpop.f32.mrb[0].mxu0
    %559 = vmatprep.mubr.f32.mxu0 0.0
    %560 = vmatmul.mubr.f32.gmra.mrb[0].mxu0 %v478
    %v561 = vpop.f32.mrb[0].mxu0
    %v562 = vadd.f32 0.0, %v561
    %v563 = vpop.f32.mrb[0].mxu0
    %564 = vdwg.mxu0
    %s565 = scalar_lea.vmem %s4, 32
    %566 = vst.msk [vmem:[%s565] sm:$0xff] %vm65, %v547
    %567 = vst.msk [vmem:[%s565 + $0x8] sm:$0xff] %vm65, %v552
    %568 = vst.msk [vmem:[%s565 + $0x10] sm:$0xff] %vm65, %v557
    %569 = vst.msk [vmem:[%s565 + $0x18] sm:$0xff] %vm65, %v562
    // Predicated region
    $region40: #{spectral_conv1d_apply.1} parent=1 // pred_check
      _
    $region41: #{spectral_conv1d_apply.1} parent=1 // pred_check_branch
      %571 = sbr.rel (0) target = $region43
    $region42: #{spectral_conv1d_apply.1} parent=1 // pred_region
      _
    $region43: #{spectral_conv1d_apply.1} parent=1 // pred_fallthru
      _
    // Predicated region
    $region44: #{spectral_conv1d_apply.1} parent=1 // pred_check
      _
    $region45: #{spectral_conv1d_apply.1} parent=1 // pred_check_branch
      %573 = sbr.rel (0) target = $region47
    $region46: #{spectral_conv1d_apply.1} parent=1 // pred_region
      _
    $region47: #{spectral_conv1d_apply.1} parent=1 // pred_fallthru
      _
    %574 = vsyncpa [#allocation5], 1
    %575 = vsyncpa [#allocation7], 1

</llo_original>
